<compile_context>
chip_gen: v7x
topology: tpu7x:2x2x1
jax: 0.10.0
libtpu: 0.0.40
codegen_flags: <defaults>
</compile_context>

<pallas_src>
import functools

import numpy as np
import jax
import jax.numpy as jnp
from jax.experimental import pallas as pl
from jax.experimental.pallas import tpu as pltpu


def _round_up(x, m):
    return ((x + m - 1) // m) * m


def _sublane_tile(dtype):
    # (sublane, lane) native tile is (8,128) for 4-byte, (16,128) for 2-byte,
    # (32,128) for 1-byte dtypes.
    return {4: 8, 2: 16, 1: 32}.get(jnp.dtype(dtype).itemsize, 8)


def _pick_row_block(batch, sub):
    """Row block: full batch if small (a full-dim block is always legal),
    otherwise a multiple of the dtype's sublane tile, capped at 64 rows, and
    leaving >= 2 grid steps so megacore / pipelining have work to shard."""
    if batch <= sub:
        return batch
    tb = min(64, (batch // 2 // sub) * sub)
    return max(tb, sub)


def _shift_full_kernel(shift_ref, x_ref, o_ref, *, width):
    """Small path. x_ref/o_ref: (tb, W) full-lane-width blocks.
    out[r, j] = x[r, j - s] if 0 <= j - s < width else 0 (s in lane units)."""
    s = shift_ref[0]
    x = x_ref[...]
    rolled = pltpu.roll(x, jnp.mod(s, width), x.ndim - 1)
    col = jax.lax.broadcasted_iota(jnp.int32, x.shape, x.ndim - 1)
    src = col - s
    valid = (src >= 0) & (src < width)
    o_ref[...] = jnp.where(valid, rolled, jnp.zeros_like(rolled))


def _shift_tiled_kernel(shift_ref, x_ref, halo_ref, o_ref, *,
                        width, lane_tile, halo_width):
    """Lane-tiled path. x_ref: (tb, lane_tile) covering lanes [col0, col0+TL);
    halo_ref: (tb, halo_width) covering the neighbouring halo-width block
    (left neighbour for s > 0, right neighbour for s < 0); |s| <= halo_width."""
    s = shift_ref[0]                          # shift in flattened lane units
    t = pl.program_id(1)
    col0 = t * lane_tile                      # first global lane of this tile

    x = x_ref[...]
    halo = halo_ref[...]

    j = jax.lax.broadcasted_iota(jnp.int32, x.shape, x.ndim - 1)
    src = col0 + j - s                        # global source lane per output lane
    valid = (src >= 0) & (src < width)
    from_main = (src >= col0) & (src < col0 + lane_tile)

    # Main contribution: in-tile circular roll; wrapped lanes are replaced by
    # the halo / zero mask below.
    main_val = pltpu.roll(x, jnp.mod(s, lane_tile), x.ndim - 1)

    # Halo contribution: zero-extend the narrow halo tile to lane_tile lanes
    # and rotate it so the needed neighbour lanes land at the tile edge.
    pad = lane_tile - halo_width
    if pad > 0:
        ext = jnp.concatenate(
            [halo, jnp.zeros(halo.shape[:-1] + (pad,), halo.dtype)], axis=-1)
    else:
        ext = halo
    k_halo = jnp.mod(jnp.where(s > 0, s - halo_width, s), lane_tile)
    halo_val = pltpu.roll(ext, k_halo, ext.ndim - 1)

    o_ref[...] = jnp.where(valid,
                           jnp.where(from_main, main_val, halo_val),
                           jnp.zeros_like(x))


def _shift_sequence_pallas(seq_1hot, shift, *, shift_max, lane_block=None):
    """seq_1hot: (B, L, C); shift: python int or traced int32 scalar (sequence
    positions, |shift| <= shift_max); shift_max: static bound for halo sizing."""
    B, L, C = seq_1hot.shape
    W = L * C
    dtype = seq_1hot.dtype
    itemsize = jnp.dtype(dtype).itemsize
    sub = _sublane_tile(dtype)
    tb = _pick_row_block(B, sub)

    # Row-major flatten: layout-only (no transpose / relayout), seq axis on lanes.
    x2d = seq_1hot.reshape(B, W)
    shift_lanes = (jnp.asarray(shift, jnp.int32) * C).reshape((1,))

    halo_elems = max(int(shift_max) * C, 1)
    HW = _round_up(halo_elems, 128)

    if lane_block is None:
        # ~1 MiB per buffer: 3 arrays x double buffering stays far below the
        # scoped VMEM limit on every generation (incl. v7x's 64 MiB physical).
        TL = max(8 * HW,
                 _round_up(max((1 << 20) // max(tb * itemsize, 1), 1024), HW))
    else:
        TL = _round_up(max(int(lane_block), HW), HW)

    if W <= 2 * TL:
        # ---- small/medium sequences: one full-width lane block per row block
        # (full-dim last block is exempt from the 128 rule; no host pad/slice).
        out2d = pl.pallas_call(
            functools.partial(_shift_full_kernel, width=W),
            out_shape=jax.ShapeDtypeStruct((B, W), dtype),
            grid_spec=pltpu.PrefetchScalarGridSpec(
                num_scalar_prefetch=1,
                grid=(pl.cdiv(B, tb),),
                in_specs=[pl.BlockSpec((tb, W), lambda i, s_ref: (i, 0))],
                out_specs=pl.BlockSpec((tb, W), lambda i, s_ref: (i, 0)),
            ),
            compiler_params=pltpu.CompilerParams(
                dimension_semantics=("parallel",),
                vmem_limit_bytes=32 * 1024 * 1024),
        )(shift_lanes, x2d)
    else:
        # ---- long sequences: lane-tiled grid with a narrow neighbour halo.
        R = TL // HW                      # halo blocks per lane tile
        nhb = pl.cdiv(W, HW)              # number of halo-width lane blocks

        def main_map(i, t, s_ref):
            return (i, t)

        def halo_map(i, t, s_ref):
            s = s_ref[0]
            d = jnp.where(s > 0, -1, jnp.where(s < 0, R, 0))
            # Clamp to a valid block; clamped loads only feed masked lanes.
            return (i, jnp.clip(t * R + d, 0, nhb - 1))

        out2d = pl.pallas_call(
            functools.partial(_shift_tiled_kernel, width=W, lane_tile=TL,
                              halo_width=HW),
            out_shape=jax.ShapeDtypeStruct((B, W), dtype),
            grid_spec=pltpu.PrefetchScalarGridSpec(
                num_scalar_prefetch=1,
                grid=(pl.cdiv(B, tb), pl.cdiv(W, TL)),
                in_specs=[pl.BlockSpec((tb, TL), main_map),
                          pl.BlockSpec((tb, HW), halo_map)],
                out_specs=pl.BlockSpec((tb, TL), main_map),
            ),
            compiler_params=pltpu.CompilerParams(
                dimension_semantics=("parallel", "parallel"),
                vmem_limit_bytes=32 * 1024 * 1024),
        )(shift_lanes, x2d, x2d)   # same array twice: main tile + halo tile

    return out2d.reshape(B, L, C)


class StochasticShift:
    """JAX/Pallas port of akita_torch StochasticShift (forward pass)."""

    def __init__(self, shift_max=0, symmetric=True, pad=0, given_shift=0,
                 deterministic=False):
        self.shift_max = shift_max
        self.symmetric = symmetric
        self.pad = pad  # TODO(synk): 'uniform' pad mode is undefined in the reference impl; zero padding is used.
        self.given_shift = given_shift
        self.deterministic = deterministic
        if symmetric:
            self.augment_shifts = np.arange(-shift_max, shift_max + 1)
            if not (-shift_max <= given_shift <= shift_max):
                raise ValueError(
                    f"Given shift {given_shift} is out of range for symmetric "
                    f"shifts [-{shift_max}, {shift_max}]")
        else:
            self.augment_shifts = np.arange(0, shift_max + 1)
            if not (0 <= given_shift <= shift_max):
                raise ValueError(
                    f"Given shift {given_shift} is out of range for "
                    f"non-symmetric shifts [0, {shift_max}]")

    def __call__(self, seq_1hot, *, training=True, rng_key=None):
        if not training:
            return seq_1hot
        if self.deterministic:
            shift = jnp.int32(self.given_shift)
        else:
            if rng_key is None:
                raise ValueError("rng_key is required for stochastic shifts")
            shifts = jnp.asarray(self.augment_shifts, dtype=jnp.int32)
            idx = jax.random.randint(rng_key, (), 0, shifts.shape[0])
            shift = shifts[idx]              # stays on device; no host sync
        return _shift_sequence_pallas(seq_1hot, shift, shift_max=self.shift_max)


def _ref_shift(x, shift):
    """Numpy reference matching the PyTorch shift_sequence."""
    x = np.asarray(x)
    if shift == 0:
        return x
    pad = np.zeros((x.shape[0], abs(shift), x.shape[2]), x.dtype)
    if shift > 0:
        return np.concatenate([pad, x[:, :-shift, :]], axis=1)
    return np.concatenate([x[:, -shift:, :], pad], axis=1)


if __name__ == "__main__":
    key = jax.random.PRNGKey(0)
    k_seq, k_seq2, k_shift = jax.random.split(key, 3)

    # --- small path: (B, L, C) = (2, 32, 4) -> W = 128, single lane block.
    B, L, C = 2, 32, 4
    seq_small = jax.nn.one_hot(jax.random.randint(k_seq, (B, L), 0, C), C,
                               dtype=jnp.float32)
    for s in (-2, -1, 0, 1, 2):
        out = jax.block_until_ready(
            _shift_sequence_pallas(seq_small, s, shift_max=2))
        np.testing.assert_allclose(np.asarray(out), _ref_shift(seq_small, s),
                                   rtol=0, atol=0)

    # --- lane-tiled path: W = 2048 split into 512-lane tiles + 128-lane halo.
    B2, L2, C2 = 8, 512, 4
    seq_big = jax.nn.one_hot(jax.random.randint(k_seq2, (B2, L2), 0, C2), C2,
                             dtype=jnp.float32)
    for s in (-2, -1, 0, 1, 2):
        out = jax.block_until_ready(
            _shift_sequence_pallas(seq_big, s, shift_max=2, lane_block=512))
        np.testing.assert_allclose(np.asarray(out), _ref_shift(seq_big, s),
                                   rtol=0, atol=0)

    # --- narrow dtype (bf16) through the tiled path (dtype-aware row block).
    seq_bf16 = seq_big[:4].astype(jnp.bfloat16)
    out_bf16 = jax.block_until_ready(
        _shift_sequence_pallas(seq_bf16, 1, shift_max=2, lane_block=512))
    np.testing.assert_allclose(
        np.asarray(jnp.asarray(out_bf16, jnp.float32)),
        _ref_shift(np.asarray(jnp.asarray(seq_bf16, jnp.float32)), 1),
        rtol=0, atol=0)

    # --- training-mode forward, jitted end to end: shift sampled on device.
    mod = StochasticShift(shift_max=2, symmetric=True)
    fwd = jax.jit(lambda x, k: mod(x, training=True, rng_key=k))
    out_train = jax.block_until_ready(fwd(seq_small, k_shift))
    assert out_train.shape == seq_small.shape
    drawn = int(np.arange(-2, 3)[int(jax.random.randint(k_shift, (), 0, 5))])
    np.testing.assert_allclose(np.asarray(out_train),
                               _ref_shift(seq_small, drawn))

    # --- inference mode is an identity pass-through.
    np.testing.assert_allclose(np.asarray(mod(seq_small, training=False)),
                               np.asarray(seq_small))

    # --- deterministic mode with given_shift.
    mod_det = StochasticShift(shift_max=2, symmetric=True, given_shift=2,
                              deterministic=True)
    out_det = jax.block_until_ready(mod_det(seq_small, training=True))
    np.testing.assert_allclose(np.asarray(out_det), _ref_shift(seq_small, 2))

    print("KERNEL_OK")
</pallas_src>

<mosaic_0001>
module attributes {stable_mosaic.version = 11 : i64} {
  func.func @_shift_full_kernel(%arg0: i32, %arg1: memref<1xi32, #tpu.memory_space<smem>>, %arg2: memref<2x128xf32, #tpu.memory_space<vmem>>, %arg3: memref<2x128xf32, #tpu.memory_space<vmem>>) attributes {dimension_semantics = [#tpu.dimension_semantics<parallel>], iteration_bounds = array<i64: 1>, scalar_prefetch = 1 : i64, scratch_operands = 0 : i64, tpu.core_type = #tpu.core_type<tc>, window_params = [{transform_indices = @transform_0, window_bounds = array<i64: 2, 128>}, {transform_indices = @transform_1, window_bounds = array<i64: 2, 128>}]} {
    %c0 = arith.constant 0 : index
    %0 = memref.load %arg1[%c0] : memref<1xi32, #tpu.memory_space<smem>>
    %c0_0 = arith.constant 0 : index
    %c0_1 = arith.constant 0 : index
    %1 = vector.load %arg2[%c0_0, %c0_1] : memref<2x128xf32, #tpu.memory_space<vmem>>, vector<2x128xf32>
    %c128_i32 = arith.constant 128 : i32
    %c0_i32 = arith.constant 0 : i32
    %2 = arith.cmpi eq, %c128_i32, %c0_i32 : i32
    %c1_i32 = arith.constant 1 : i32
    %3 = arith.select %2, %c1_i32, %c128_i32 : i32
    %4 = arith.remsi %0, %3 : i32
    %c0_i32_2 = arith.constant 0 : i32
    %5 = arith.cmpi ne, %4, %c0_i32_2 : i32
    %c0_i32_3 = arith.constant 0 : i32
    %6 = arith.cmpi slt, %4, %c0_i32_3 : i32
    %c0_i32_4 = arith.constant 0 : i32
    %7 = arith.cmpi slt, %3, %c0_i32_4 : i32
    %8 = arith.xori %6, %7 : i1
    %9 = arith.andi %8, %5 : i1
    %10 = arith.addi %4, %3 : i32
    %11 = arith.select %9, %10, %4 : i32
    %12 = tpu.dynamic_rotate %1 by %11 dim 1 : vector<2x128xf32>, i32 -> vector<2x128xf32>
    %13 = tpu.iota {dimensions = array<i32: 1>} : vector<2x128xi32>
    %14 = vector.broadcast %0 : i32 to vector<2x128xi32>
    %15 = arith.subi %13, %14 : vector<2x128xi32>
    %c0_i32_5 = arith.constant 0 : i32
    %16 = vector.broadcast %c0_i32_5 : i32 to vector<2x128xi32>
    %17 = arith.cmpi sge, %15, %16 : vector<2x128xi32>
    %c128_i32_6 = arith.constant 128 : i32
    %18 = vector.broadcast %c128_i32_6 : i32 to vector<2x128xi32>
    %19 = arith.cmpi slt, %15, %18 : vector<2x128xi32>
    %20 = arith.andi %17, %19 : vector<2x128xi1>
    %cst = arith.constant 0.000000e+00 : f32
    %21 = vector.broadcast %cst : f32 to vector<2x128xf32>
    %22 = arith.select %20, %12, %21 : vector<2x128xi1>, vector<2x128xf32>
    %c0_7 = arith.constant 0 : index
    %c0_8 = arith.constant 0 : index
    %23 = vector.load %arg3[%c0_7, %c0_8] : memref<2x128xf32, #tpu.memory_space<vmem>>, vector<2x128xf32>
    tpu.vector_store %arg3[%c0_7, %c0_8], %22 {strides = array<i32>} : memref<2x128xf32, #tpu.memory_space<vmem>>, vector<2x128xf32>,
    return
  }
  func.func @transform_0(%arg0: i32, %arg1: memref<1xi32, #tpu.memory_space<smem>>) -> (i32, i32) {
    %c0_i32 = arith.constant 0 : i32
    %c0_i32_0 = arith.constant 0 : i32
    return %arg0, %c0_i32 : i32, i32
  }
  func.func @transform_1(%arg0: i32, %arg1: memref<1xi32, #tpu.memory_space<smem>>) -> (i32, i32) {
    %c0_i32 = arith.constant 0 : i32
    %c0_i32_0 = arith.constant 0 : i32
    return %arg0, %c0_i32 : i32, i32
  }
}

</mosaic_0001>

<llo_original>
// kernel: tpu_custom_call.1
$region0: #{tpu_custom_call.1}
  #allocation0 [shape = 'u32[]', space=smem, size = 0x4, offset = 0x4, fixed_abs, tag = 'smem constant byte address 0x4 - core index']
  #allocation1 [shape = 'u32[144,128]{1,0:T(1,128)}', space=vmem, size = 0x12000, scoped, tag = 'internal scratch']
  #allocation2 [shape = 's32[1]{0}', space=sflag, size = 0x4, scoped, tag = 'scoped memory for tpu_custom_call.1']
  #allocation3 [shape = 's32[1]{0:T(128)S(6)}', space=smem, size = 0x200, scoped, tag = 'prefetched SMEM operand 0']
  %s0 = inlined_call_operand.<no memory space> [shape: s32[1], index: 0, kind: input, shape index: {}]
  %s1 = inlined_call_operand.vmem [shape: f32[2,128], index: 1, kind: input, shape index: {}]
  %s2 = inlined_call_operand.hbm [shape: f32[2,128], index: 2, kind: output, shape index: {}]
  %s3 = sld [smem:[#allocation0]]
  $region14: #{tpu_custom_call.1} parent=0
    _
  %s5 = ssub.s32 1, %s3
  %s6 = scalar_select 0, %s5, %s3
  %7 = sst [smem:[#allocation3]] %s0
  $region1: #{tpu_custom_call.1} parent=0
    #allocation4 [shape = 'u8[1024]{0}', space=vmem, size = 0x400, scoped, tag = 'output window, operand 0, single buffered']
    #allocation5 [shape = 's32[1]{0}', space=sflag, size = 0x4, scoped, tag = 'scoped memory for tpu_custom_call.1']
    %8 = vsyncpa [#allocation5], 0
    // Predicated region
    $region2: #{tpu_custom_call.1} parent=1 // pred_check
      _
    $region3: #{tpu_custom_call.1} parent=1 // pred_check_branch
      %10 = sbr.rel (0) target = $region5
    $region4: #{tpu_custom_call.1} parent=1 // pred_region
      _
    $region5: #{tpu_custom_call.1} parent=1 // pred_fallthru
      _
    %s11 = sld [smem:[#allocation3]]
    %v12 = vld [vmem:[%s1] sm:$0x3]
    %p13 = scmp.lt.s32.totalorder %s11, 0
    %s14 = ssub.s32 0, %s11
    %s15 = scalar_select %p13, %s14, %s11
    %s16 = sand.u32 %s15, 127
    %s17 = ssub.s32 0, %s16
    %s18 = scalar_select %p13, %s17, %s16
    %p19 = scmp.ne.s32.totalorder %s18, 0
    %p20 = scmp.lt.s32.totalorder %s18, 0
    %p21 = pnand %p20, %p19
    %p22 = pneg %p21
    %s23 = sadd.s32 %s18, 128
    %s24 = scalar_select %p22, %s23, %s18
    %s25 = sand.u32 %s24, 127
    %s26 = sand.u32 %s25, 127
    %27 = vrot.lane.b32.xlu0 %v12, %s26
    %v28 = vpop.permute.xlu0 %27
    %v29 = vlaneseq
    %v30 = vand.u32 %v29, 127
    %v31 = vstv %s11
    %v32 = vsub.s32 %v30, %v31
    %vm33 = vcmp.ge.s32.totalorder %v32, 0
    %vm34 = vcmp.lt.s32.totalorder %v32, 128
    %vm35 = vmand %vm33, %vm34
    %v36 = vsel %vm35, %v28, 0.0
    %37 = vst [vmem:[#allocation4] sm:$0x3] %v36
    // Predicated region
    $region6: #{tpu_custom_call.1} parent=1 // pred_check
      _
    $region7: #{tpu_custom_call.1} parent=1 // pred_check_branch
      %39 = sbr.rel (0) target = $region9
    $region8: #{tpu_custom_call.1} parent=1 // pred_region
      %s41 = ssub.s32 32, 32
      %42 = vsyncadd [#allocation5], %s41
      %s44 = sshll.u32 [#allocation4], 4
      %s45 = int_to_ptr.vmem [resolvable:$true] %s44
      %47 = dma.vmem_to_hbm [thread:$0]  %s45, 32, %s2, [#allocation5]
    $region9: #{tpu_custom_call.1} parent=1 // pred_fallthru
      _
    // Predicated region
    $region10: #{tpu_custom_call.1} parent=1 // pred_check
      _
    $region11: #{tpu_custom_call.1} parent=1 // pred_check_branch
      %49 = sbr.rel (0) target = $region13
    $region12: #{tpu_custom_call.1} parent=1 // pred_region
      %50 = dma.done [#allocation5], 32
    $region13: #{tpu_custom_call.1} parent=1 // pred_fallthru
      _
    %51 = vsyncpa [#allocation5], 1

</llo_original>
